<compile_context>
chip_gen: v7x
topology: tpu7x:2x2x1
jax: 0.10.0
libtpu: 0.0.40
codegen_flags: <defaults>
</compile_context>

<pallas_src>
import functools

import jax
import jax.numpy as jnp
from jax import lax
from jax.experimental import pallas as pl
from jax.experimental.pallas import tpu as pltpu


def _round_up(x, m):
    return ((x + m - 1) // m) * m


# ----------------------------------------------------------------------------
# Fused Pallas kernel: whole MLP in one body
# ----------------------------------------------------------------------------
def _fused_mlp_kernel(*refs, n_hidden, hidden_dims, out_pad, eps, neg_slope):
    """refs = (x, w_0..w_{n_hidden-1}, w_final, vec_table, out).

    x          : (TM, Din) bf16 batch tile.
    w_i        : (in_i, out_i) bf16, whole array resident (single-buffered).
    w_final    : (last_hidden, out_pad) bf16, lane-padded.
    vec_table  : (3*n_hidden + 1, maxw) f32 — rows are [b, gamma, beta] per
                 hidden layer, then the final bias.  Sliced statically below.
    out        : (TM, out_pad) f32.
    Inter-layer activations stay in VMEM/vregs (never written to HBM).
    """
    x_ref = refs[0]
    w_refs = refs[1:1 + n_hidden]
    wf_ref = refs[1 + n_hidden]
    vec_ref = refs[2 + n_hidden]
    o_ref = refs[3 + n_hidden]

    h = x_ref[...]                                        # (TM, Din) bf16
    row = 0
    for li in range(n_hidden):
        width = hidden_dims[li]
        b = vec_ref[row:row + 1, :width]                  # (1, width) f32
        g = vec_ref[row + 1:row + 2, :width]
        beta = vec_ref[row + 2:row + 3, :width]
        row += 3

        # bf16 x bf16 matmul, f32 accumulation on the MXU.
        y = jnp.dot(h.astype(jnp.bfloat16), w_refs[li][...],
                    preferred_element_type=jnp.float32) + b

        # LayerNorm (f32, biased variance, matching torch.nn.LayerNorm).
        # Both reductions are issued off y so the XLU work overlaps.
        mean = jnp.mean(y, axis=-1, keepdims=True)
        mean_sq = jnp.mean(y * y, axis=-1, keepdims=True)
        var = jnp.maximum(mean_sq - mean * mean, 0.0)
        z = (y - mean) * lax.rsqrt(var + eps) * g + beta

        # LeakyReLU(negative_slope) in f32.
        h = jnp.where(z >= 0, z, neg_slope * z)

    bf = vec_ref[row:row + 1, :out_pad]
    o_ref[...] = jnp.dot(h.astype(jnp.bfloat16), wf_ref[...],
                         preferred_element_type=jnp.float32) + bf


# ----------------------------------------------------------------------------
# Wrapper around pallas_call
# ----------------------------------------------------------------------------
def _const_spec(arr):
    """Full-extent block, replicated across the batch-tile grid.

    The index_map is constant, so double-buffering buys nothing -> request a
    single buffer to halve the resident VMEM (falls back gracefully if the
    installed JAX does not expose pipeline_mode on BlockSpec)."""
    nd = arr.ndim
    idx = lambda i, _nd=nd: (0,) * _nd
    try:
        return pl.BlockSpec(arr.shape, idx, pipeline_mode=pl.Buffered(1))
    except TypeError:
        return pl.BlockSpec(arr.shape, idx)


def mlp_forward(params, x, *, eps=1e-5, neg_slope=0.01):
    """x: (B, ...) -> flattened to (B, features), like torch reshape(B, -1)."""
    B = x.shape[0]
    # Cast the activation matmul operand to bf16 at the HBM boundary
    # (halves input DMA; accumulation stays f32 inside the kernel).
    h = x.reshape(B, -1).astype(jnp.float32).astype(jnp.bfloat16)
    Din = h.shape[1]

    # --- batch tiling: 8-sublane multiples; 256-row tiles for big batches
    #     (256x256 MXU on v6e/v7x), 128 otherwise; tiny batches just round up.
    #     On v7x prefer >=2 tiles so the "parallel" axis can use both TCs.
    if B >= 512:
        TM = 256
    elif B >= 128:
        TM = 128
    else:
        TM = _round_up(B, 8)
    B_pad = _round_up(B, TM)
    if B_pad != B:
        h = jnp.pad(h, ((0, B_pad - B), (0, 0)))

    ws = params["ws"]
    wf = params["wf"]
    vecs = params["vecs"]
    hidden_dims = tuple(params["hidden_dims"])
    out_dim = params["out_dim"]
    out_pad = params["out_pad"]
    n_hidden = len(ws)

    # --- assemble inputs + specs.
    inputs = [h] + list(ws) + [wf, vecs]
    in_specs = [pl.BlockSpec((TM, Din), lambda i: (i, 0))]
    in_specs += [_const_spec(a) for a in ws]
    in_specs += [_const_spec(wf), _const_spec(vecs)]

    # --- explicit VMEM budget: resident weights (single-buffered) + double
    #     buffered input/output tiles + headroom for intermediates/scratch.
    def _nbytes(a):
        return a.size * a.dtype.itemsize
    weight_bytes = sum(_nbytes(a) for a in ws) + _nbytes(wf) + _nbytes(vecs)
    tile_bytes = 2 * (TM * Din * 2) + 2 * (TM * out_pad * 4)
    vmem_limit = int(min(max(weight_bytes + tile_bytes + (8 << 20), 16 << 20),
                         64 << 20))

    kern = functools.partial(
        _fused_mlp_kernel,
        n_hidden=n_hidden,
        hidden_dims=hidden_dims,
        out_pad=out_pad,
        eps=eps,
        neg_slope=neg_slope,
    )

    out = pl.pallas_call(
        kern,
        out_shape=jax.ShapeDtypeStruct((B_pad, out_pad), jnp.float32),
        grid=(B_pad // TM,),
        in_specs=in_specs,
        out_specs=pl.BlockSpec((TM, out_pad), lambda i: (i, 0)),
        compiler_params=pltpu.CompilerParams(
            dimension_semantics=("parallel",),
            vmem_limit_bytes=vmem_limit),
    )(*inputs)

    return out[:B, :out_dim]


# ----------------------------------------------------------------------------
# Parameter construction (deterministic, xavier-uniform like the module).
# All padding / packing / dtype casts are done ONCE here, not per forward.
# ----------------------------------------------------------------------------
def xavier_uniform(key, fan_in, fan_out):
    bound = jnp.sqrt(6.0 / (fan_in + fan_out))
    # Stored pre-transposed as (in, out), i.e. torch weight (out, in) .T
    return jax.random.uniform(key, (fan_in, fan_out), jnp.float32, -bound, bound)


def make_mlp_params(key, input_dim, hidden_dim, output_dim, n_layer=3):
    """Mirrors MLP.__init__ layer-dim schedule with xavier init, zero bias,
    default LayerNorm affine (gamma=1, beta=0).  Weights stored in bf16,
    final projection lane-padded, small vectors packed into one f32 table."""
    dims = []
    current = hidden_dim
    dims.append((input_dim, current))
    for _ in range(n_layer - 1):
        nxt = max(current // 2, output_dim)
        dims.append((current, nxt))
        current = nxt
    hidden_dims = [d[1] for d in dims]

    ws = []
    for fi, fo in dims:
        key, sub = jax.random.split(key)
        ws.append(xavier_uniform(sub, fi, fo).astype(jnp.bfloat16))

    out_pad = _round_up(output_dim, 128)
    key, sub = jax.random.split(key)
    wf = xavier_uniform(sub, current, output_dim)
    wf = jnp.pad(wf, ((0, 0), (0, out_pad - output_dim))).astype(jnp.bfloat16)

    # Packed vector table: [b, gamma, beta] per hidden layer, then final bias.
    maxw = _round_up(max(max(hidden_dims), output_dim), 128)
    rows = []
    for d in hidden_dims:
        rows.append(jnp.zeros((maxw,), jnp.float32))                    # bias
        rows.append(jnp.zeros((maxw,), jnp.float32).at[:d].set(1.0))    # gamma
        rows.append(jnp.zeros((maxw,), jnp.float32))                    # beta
    rows.append(jnp.zeros((maxw,), jnp.float32))                        # final bias
    vecs = jnp.stack(rows, axis=0)

    return dict(ws=ws, wf=wf, vecs=vecs, hidden_dims=hidden_dims,
                out_dim=output_dim, out_pad=out_pad)


# ----------------------------------------------------------------------------
# Pure-JAX reference (mirrors the kernel's bf16-matmul / f32-LN arithmetic)
# ----------------------------------------------------------------------------
def mlp_forward_ref(params, x, eps=1e-5, neg_slope=0.01):
    h = x.reshape(x.shape[0], -1).astype(jnp.float32)
    vecs = params["vecs"]
    row = 0
    for li, w in enumerate(params["ws"]):
        width = params["hidden_dims"][li]
        b = vecs[row, :width]
        g = vecs[row + 1, :width]
        beta = vecs[row + 2, :width]
        row += 3
        y = jnp.dot(h.astype(jnp.bfloat16), w,
                    preferred_element_type=jnp.float32) + b
        mean = jnp.mean(y, axis=-1, keepdims=True)
        mean_sq = jnp.mean(y * y, axis=-1, keepdims=True)
        var = jnp.maximum(mean_sq - mean * mean, 0.0)
        z = (y - mean) * lax.rsqrt(var + eps) * g + beta
        h = jnp.where(z >= 0, z, neg_slope * z)
    bf = vecs[row, :params["out_dim"]]
    wf = params["wf"][:, :params["out_dim"]]
    return jnp.dot(h.astype(jnp.bfloat16), wf,
                   preferred_element_type=jnp.float32) + bf


if __name__ == "__main__":
    key = jax.random.PRNGKey(0)
    k_x, k_p = jax.random.split(key)

    # Small NCHW-style input: (B=2, C=4, H=16, W=16) -> flattened feature 1024
    B, C, H, W = 2, 4, 16, 16
    input_dim = C * H * W            # 1024
    hidden_dim = 128
    output_dim = 16
    n_layer = 3                      # dims: 1024 -> 128 -> 64 -> 32 -> 16

    x = jax.random.normal(k_x, (B, C, H, W), jnp.float32)
    params = make_mlp_params(k_p, input_dim, hidden_dim, output_dim, n_layer)

    out = mlp_forward(params, x)
    out = jax.block_until_ready(out)

    ref = mlp_forward_ref(params, x)
    assert out.shape == (B, output_dim), out.shape
    assert jnp.allclose(out, ref, atol=2e-3, rtol=2e-3), (
        "mismatch vs JAX reference, max abs err = "
        f"{float(jnp.max(jnp.abs(out - ref)))}")

    print("KERNEL_OK")
</pallas_src>

<mosaic_0001>
module attributes {stable_mosaic.version = 11 : i64} {
  func.func @_fused_mlp_kernel(%arg0: i32, %arg1: memref<8x1024xbf16, #tpu.memory_space<vmem>>, %arg2: memref<1024x128xbf16, #tpu.memory_space<vmem>>, %arg3: memref<128x64xbf16, #tpu.memory_space<vmem>>, %arg4: memref<64x32xbf16, #tpu.memory_space<vmem>>, %arg5: memref<32x128xbf16, #tpu.memory_space<vmem>>, %arg6: memref<10x128xf32, #tpu.memory_space<vmem>>, %arg7: memref<8x128xf32, #tpu.memory_space<vmem>>) attributes {dimension_semantics = [#tpu.dimension_semantics<parallel>], iteration_bounds = array<i64: 1>, scalar_prefetch = 0 : i64, scratch_operands = 0 : i64, tpu.core_type = #tpu.core_type<tc>, window_params = [{transform_indices = @transform_0, window_bounds = array<i64: 8, 1024>}, {pipeline_mode = #tpu.pipeline_mode<synchronous>, transform_indices = @transform_1, window_bounds = array<i64: 1024, 128>}, {pipeline_mode = #tpu.pipeline_mode<synchronous>, transform_indices = @transform_2, window_bounds = array<i64: 128, 64>}, {pipeline_mode = #tpu.pipeline_mode<synchronous>, transform_indices = @transform_3, window_bounds = array<i64: 64, 32>}, {pipeline_mode = #tpu.pipeline_mode<synchronous>, transform_indices = @transform_4, window_bounds = array<i64: 32, 128>}, {pipeline_mode = #tpu.pipeline_mode<synchronous>, transform_indices = @transform_5, window_bounds = array<i64: 10, 128>}, {transform_indices = @transform_6, window_bounds = array<i64: 8, 128>}]} {
    %c0 = arith.constant 0 : index
    %c0_0 = arith.constant 0 : index
    %0 = vector.load %arg1[%c0, %c0_0] : memref<8x1024xbf16, #tpu.memory_space<vmem>>, vector<8x1024xbf16>
    %c0_1 = arith.constant 0 : index
    %c0_2 = arith.constant 0 : index
    %1 = vector.load %arg6[%c0_1, %c0_2] : memref<10x128xf32, #tpu.memory_space<vmem>>, vector<1x128xf32>
    %c1 = arith.constant 1 : index
    %c0_3 = arith.constant 0 : index
    %2 = vector.load %arg6[%c1, %c0_3] : memref<10x128xf32, #tpu.memory_space<vmem>>, vector<1x128xf32>
    %c2 = arith.constant 2 : index
    %c0_4 = arith.constant 0 : index
    %3 = vector.load %arg6[%c2, %c0_4] : memref<10x128xf32, #tpu.memory_space<vmem>>, vector<1x128xf32>
    %c0_5 = arith.constant 0 : index
    %c0_6 = arith.constant 0 : index
    %4 = vector.load %arg2[%c0_5, %c0_6] : memref<1024x128xbf16, #tpu.memory_space<vmem>>, vector<1024x128xbf16>
    %cst = arith.constant dense<0.000000e+00> : vector<8x128xf32>
    %5 = tpu.matmul %0, %4, %cst {dimension_numbers = #tpu.dot_dimension_numbers<[1], [0], [0], [1], [0, 0, 1, 1], [], []>} : vector<8x1024xbf16>, vector<1024x128xbf16>, vector<8x128xf32> -> vector<8x128xf32>
    %6 = vector.broadcast %1 : vector<1x128xf32> to vector<8x128xf32>
    %7 = arith.addf %5, %6 : vector<8x128xf32>
    %cst_7 = arith.constant dense<0.000000e+00> : vector<8xf32>
    %8 = vector.multi_reduction <add>, %7, %cst_7 [1] : vector<8x128xf32> to vector<8xf32>
    %9 = vector.shape_cast %8 : vector<8xf32> to vector<8x1xf32>
    %cst_8 = arith.constant 1.280000e+02 : f32
    %10 = vector.broadcast %cst_8 : f32 to vector<8x1xf32>
    %11 = arith.divf %9, %10 : vector<8x1xf32>
    %12 = arith.mulf %7, %7 : vector<8x128xf32>
    %cst_9 = arith.constant dense<0.000000e+00> : vector<8xf32>
    %13 = vector.multi_reduction <add>, %12, %cst_9 [1] : vector<8x128xf32> to vector<8xf32>
    %14 = vector.shape_cast %13 : vector<8xf32> to vector<8x1xf32>
    %cst_10 = arith.constant 1.280000e+02 : f32
    %15 = vector.broadcast %cst_10 : f32 to vector<8x1xf32>
    %16 = arith.divf %14, %15 : vector<8x1xf32>
    %17 = arith.mulf %11, %11 : vector<8x1xf32>
    %18 = arith.subf %16, %17 : vector<8x1xf32>
    %cst_11 = arith.constant 0.000000e+00 : f32
    %19 = vector.broadcast %cst_11 : f32 to vector<8x1xf32>
    %20 = arith.maximumf %18, %19 : vector<8x1xf32>
    %21 = vector.broadcast %11 : vector<8x1xf32> to vector<8x128xf32>
    %22 = arith.subf %7, %21 : vector<8x128xf32>
    %cst_12 = arith.constant 9.99999974E-6 : f32
    %23 = vector.broadcast %cst_12 : f32 to vector<8x1xf32>
    %24 = arith.addf %20, %23 : vector<8x1xf32>
    %25 = math.rsqrt %24 : vector<8x1xf32>
    %26 = vector.broadcast %25 : vector<8x1xf32> to vector<8x128xf32>
    %27 = arith.mulf %22, %26 : vector<8x128xf32>
    %28 = vector.broadcast %2 : vector<1x128xf32> to vector<8x128xf32>
    %29 = arith.mulf %27, %28 : vector<8x128xf32>
    %30 = vector.broadcast %3 : vector<1x128xf32> to vector<8x128xf32>
    %31 = arith.addf %29, %30 : vector<8x128xf32>
    %cst_13 = arith.constant 0.000000e+00 : f32
    %32 = vector.broadcast %cst_13 : f32 to vector<8x128xf32>
    %33 = arith.cmpf oge, %31, %32 : vector<8x128xf32>
    %cst_14 = arith.constant 0.00999999977 : f32
    %34 = vector.broadcast %cst_14 : f32 to vector<8x128xf32>
    %35 = arith.mulf %34, %31 : vector<8x128xf32>
    %36 = arith.select %33, %31, %35 : vector<8x128xi1>, vector<8x128xf32>
    %c3 = arith.constant 3 : index
    %c0_15 = arith.constant 0 : index
    %37 = vector.load %arg6[%c3, %c0_15] : memref<10x128xf32, #tpu.memory_space<vmem>>, vector<1x64xf32>
    %c4 = arith.constant 4 : index
    %c0_16 = arith.constant 0 : index
    %38 = vector.load %arg6[%c4, %c0_16] : memref<10x128xf32, #tpu.memory_space<vmem>>, vector<1x64xf32>
    %c5 = arith.constant 5 : index
    %c0_17 = arith.constant 0 : index
    %39 = vector.load %arg6[%c5, %c0_17] : memref<10x128xf32, #tpu.memory_space<vmem>>, vector<1x64xf32>
    %40 = arith.truncf %36 : vector<8x128xf32> to vector<8x128xbf16>
    %c0_18 = arith.constant 0 : index
    %c0_19 = arith.constant 0 : index
    %41 = vector.load %arg3[%c0_18, %c0_19] : memref<128x64xbf16, #tpu.memory_space<vmem>>, vector<128x64xbf16>
    %cst_20 = arith.constant dense<0.000000e+00> : vector<8x64xf32>
    %42 = tpu.matmul %40, %41, %cst_20 {dimension_numbers = #tpu.dot_dimension_numbers<[1], [0], [0], [1], [0, 0, 1, 1], [], []>} : vector<8x128xbf16>, vector<128x64xbf16>, vector<8x64xf32> -> vector<8x64xf32>
    %43 = vector.broadcast %37 : vector<1x64xf32> to vector<8x64xf32>
    %44 = arith.addf %42, %43 : vector<8x64xf32>
    %cst_21 = arith.constant dense<0.000000e+00> : vector<8xf32>
    %45 = vector.multi_reduction <add>, %44, %cst_21 [1] : vector<8x64xf32> to vector<8xf32>
    %46 = vector.shape_cast %45 : vector<8xf32> to vector<8x1xf32>
    %cst_22 = arith.constant 6.400000e+01 : f32
    %47 = vector.broadcast %cst_22 : f32 to vector<8x1xf32>
    %48 = arith.divf %46, %47 : vector<8x1xf32>
    %49 = arith.mulf %44, %44 : vector<8x64xf32>
    %cst_23 = arith.constant dense<0.000000e+00> : vector<8xf32>
    %50 = vector.multi_reduction <add>, %49, %cst_23 [1] : vector<8x64xf32> to vector<8xf32>
    %51 = vector.shape_cast %50 : vector<8xf32> to vector<8x1xf32>
    %cst_24 = arith.constant 6.400000e+01 : f32
    %52 = vector.broadcast %cst_24 : f32 to vector<8x1xf32>
    %53 = arith.divf %51, %52 : vector<8x1xf32>
    %54 = arith.mulf %48, %48 : vector<8x1xf32>
    %55 = arith.subf %53, %54 : vector<8x1xf32>
    %cst_25 = arith.constant 0.000000e+00 : f32
    %56 = vector.broadcast %cst_25 : f32 to vector<8x1xf32>
    %57 = arith.maximumf %55, %56 : vector<8x1xf32>
    %58 = vector.broadcast %48 : vector<8x1xf32> to vector<8x64xf32>
    %59 = arith.subf %44, %58 : vector<8x64xf32>
    %cst_26 = arith.constant 9.99999974E-6 : f32
    %60 = vector.broadcast %cst_26 : f32 to vector<8x1xf32>
    %61 = arith.addf %57, %60 : vector<8x1xf32>
    %62 = math.rsqrt %61 : vector<8x1xf32>
    %63 = vector.broadcast %62 : vector<8x1xf32> to vector<8x64xf32>
    %64 = arith.mulf %59, %63 : vector<8x64xf32>
    %65 = vector.broadcast %38 : vector<1x64xf32> to vector<8x64xf32>
    %66 = arith.mulf %64, %65 : vector<8x64xf32>
    %67 = vector.broadcast %39 : vector<1x64xf32> to vector<8x64xf32>
    %68 = arith.addf %66, %67 : vector<8x64xf32>
    %cst_27 = arith.constant 0.000000e+00 : f32
    %69 = vector.broadcast %cst_27 : f32 to vector<8x64xf32>
    %70 = arith.cmpf oge, %68, %69 : vector<8x64xf32>
    %cst_28 = arith.constant 0.00999999977 : f32
    %71 = vector.broadcast %cst_28 : f32 to vector<8x64xf32>
    %72 = arith.mulf %71, %68 : vector<8x64xf32>
    %73 = arith.select %70, %68, %72 : vector<8x64xi1>, vector<8x64xf32>
    %c6 = arith.constant 6 : index
    %c0_29 = arith.constant 0 : index
    %74 = vector.load %arg6[%c6, %c0_29] : memref<10x128xf32, #tpu.memory_space<vmem>>, vector<1x32xf32>
    %c7 = arith.constant 7 : index
    %c0_30 = arith.constant 0 : index
    %75 = vector.load %arg6[%c7, %c0_30] : memref<10x128xf32, #tpu.memory_space<vmem>>, vector<1x32xf32>
    %c8 = arith.constant 8 : index
    %c0_31 = arith.constant 0 : index
    %76 = vector.load %arg6[%c8, %c0_31] : memref<10x128xf32, #tpu.memory_space<vmem>>, vector<1x32xf32>
    %77 = arith.truncf %73 : vector<8x64xf32> to vector<8x64xbf16>
    %c0_32 = arith.constant 0 : index
    %c0_33 = arith.constant 0 : index
    %78 = vector.load %arg4[%c0_32, %c0_33] : memref<64x32xbf16, #tpu.memory_space<vmem>>, vector<64x32xbf16>
    %cst_34 = arith.constant dense<0.000000e+00> : vector<8x32xf32>
    %79 = tpu.matmul %77, %78, %cst_34 {dimension_numbers = #tpu.dot_dimension_numbers<[1], [0], [0], [1], [0, 0, 1, 1], [], []>} : vector<8x64xbf16>, vector<64x32xbf16>, vector<8x32xf32> -> vector<8x32xf32>
    %80 = vector.broadcast %74 : vector<1x32xf32> to vector<8x32xf32>
    %81 = arith.addf %79, %80 : vector<8x32xf32>
    %cst_35 = arith.constant dense<0.000000e+00> : vector<8xf32>
    %82 = vector.multi_reduction <add>, %81, %cst_35 [1] : vector<8x32xf32> to vector<8xf32>
    %83 = vector.shape_cast %82 : vector<8xf32> to vector<8x1xf32>
    %cst_36 = arith.constant 3.200000e+01 : f32
    %84 = vector.broadcast %cst_36 : f32 to vector<8x1xf32>
    %85 = arith.divf %83, %84 : vector<8x1xf32>
    %86 = arith.mulf %81, %81 : vector<8x32xf32>
    %cst_37 = arith.constant dense<0.000000e+00> : vector<8xf32>
    %87 = vector.multi_reduction <add>, %86, %cst_37 [1] : vector<8x32xf32> to vector<8xf32>
    %88 = vector.shape_cast %87 : vector<8xf32> to vector<8x1xf32>
    %cst_38 = arith.constant 3.200000e+01 : f32
    %89 = vector.broadcast %cst_38 : f32 to vector<8x1xf32>
    %90 = arith.divf %88, %89 : vector<8x1xf32>
    %91 = arith.mulf %85, %85 : vector<8x1xf32>
    %92 = arith.subf %90, %91 : vector<8x1xf32>
    %cst_39 = arith.constant 0.000000e+00 : f32
    %93 = vector.broadcast %cst_39 : f32 to vector<8x1xf32>
    %94 = arith.maximumf %92, %93 : vector<8x1xf32>
    %95 = vector.broadcast %85 : vector<8x1xf32> to vector<8x32xf32>
    %96 = arith.subf %81, %95 : vector<8x32xf32>
    %cst_40 = arith.constant 9.99999974E-6 : f32
    %97 = vector.broadcast %cst_40 : f32 to vector<8x1xf32>
    %98 = arith.addf %94, %97 : vector<8x1xf32>
    %99 = math.rsqrt %98 : vector<8x1xf32>
    %100 = vector.broadcast %99 : vector<8x1xf32> to vector<8x32xf32>
    %101 = arith.mulf %96, %100 : vector<8x32xf32>
    %102 = vector.broadcast %75 : vector<1x32xf32> to vector<8x32xf32>
    %103 = arith.mulf %101, %102 : vector<8x32xf32>
    %104 = vector.broadcast %76 : vector<1x32xf32> to vector<8x32xf32>
    %105 = arith.addf %103, %104 : vector<8x32xf32>
    %cst_41 = arith.constant 0.000000e+00 : f32
    %106 = vector.broadcast %cst_41 : f32 to vector<8x32xf32>
    %107 = arith.cmpf oge, %105, %106 : vector<8x32xf32>
    %cst_42 = arith.constant 0.00999999977 : f32
    %108 = vector.broadcast %cst_42 : f32 to vector<8x32xf32>
    %109 = arith.mulf %108, %105 : vector<8x32xf32>
    %110 = arith.select %107, %105, %109 : vector<8x32xi1>, vector<8x32xf32>
    %c9 = arith.constant 9 : index
    %c0_43 = arith.constant 0 : index
    %111 = vector.load %arg6[%c9, %c0_43] : memref<10x128xf32, #tpu.memory_space<vmem>>, vector<1x128xf32>
    %112 = arith.truncf %110 : vector<8x32xf32> to vector<8x32xbf16>
    %c0_44 = arith.constant 0 : index
    %c0_45 = arith.constant 0 : index
    %113 = vector.load %arg5[%c0_44, %c0_45] : memref<32x128xbf16, #tpu.memory_space<vmem>>, vector<32x128xbf16>
    %cst_46 = arith.constant dense<0.000000e+00> : vector<8x128xf32>
    %114 = tpu.matmul %112, %113, %cst_46 {dimension_numbers = #tpu.dot_dimension_numbers<[1], [0], [0], [1], [0, 0, 1, 1], [], []>} : vector<8x32xbf16>, vector<32x128xbf16>, vector<8x128xf32> -> vector<8x128xf32>
    %115 = vector.broadcast %111 : vector<1x128xf32> to vector<8x128xf32>
    %116 = arith.addf %114, %115 : vector<8x128xf32>
    %c0_47 = arith.constant 0 : index
    %c0_48 = arith.constant 0 : index
    %117 = vector.load %arg7[%c0_47, %c0_48] : memref<8x128xf32, #tpu.memory_space<vmem>>, vector<8x128xf32>
    tpu.vector_store %arg7[%c0_47, %c0_48], %116 {strides = array<i32>} : memref<8x128xf32, #tpu.memory_space<vmem>>, vector<8x128xf32>,
    return
  }
  func.func @transform_0(%arg0: i32) -> (i32, i32) {
    %c0_i32 = arith.constant 0 : i32
    %c0_i32_0 = arith.constant 0 : i32
    return %arg0, %c0_i32 : i32, i32
  }
  func.func @transform_1(%arg0: i32) -> (i32, i32) {
    %c0_i32 = arith.constant 0 : i32
    %c0_i32_0 = arith.constant 0 : i32
    %c0_i32_1 = arith.constant 0 : i32
    return %c0_i32, %c0_i32_0 : i32, i32
  }
  func.func @transform_2(%arg0: i32) -> (i32, i32) {
    %c0_i32 = arith.constant 0 : i32
    %c0_i32_0 = arith.constant 0 : i32
    %c0_i32_1 = arith.constant 0 : i32
    return %c0_i32, %c0_i32_0 : i32, i32
  }
  func.func @transform_3(%arg0: i32) -> (i32, i32) {
    %c0_i32 = arith.constant 0 : i32
    %c0_i32_0 = arith.constant 0 : i32
    %c0_i32_1 = arith.constant 0 : i32
    return %c0_i32, %c0_i32_0 : i32, i32
  }
  func.func @transform_4(%arg0: i32) -> (i32, i32) {
    %c0_i32 = arith.constant 0 : i32
    %c0_i32_0 = arith.constant 0 : i32
    %c0_i32_1 = arith.constant 0 : i32
    return %c0_i32, %c0_i32_0 : i32, i32
  }
  func.func @transform_5(%arg0: i32) -> (i32, i32) {
    %c0_i32 = arith.constant 0 : i32
    %c0_i32_0 = arith.constant 0 : i32
    %c0_i32_1 = arith.constant 0 : i32
    return %c0_i32, %c0_i32_0 : i32, i32
  }
  func.func @transform_6(%arg0: i32) -> (i32, i32) {
    %c0_i32 = arith.constant 0 : i32
    %c0_i32_0 = arith.constant 0 : i32
    return %arg0, %c0_i32 : i32, i32
  }
}

</mosaic_0001>

<llo_original>
// kernel: tpu_custom_call.1
$region0: #{tpu_custom_call.1}
  #allocation0 [shape = 'u32[]', space=smem, size = 0x4, offset = 0x4, fixed_abs, tag = 'smem constant byte address 0x4 - core index']
  #allocation1 [shape = 'u32[144,128]{1,0:T(1,128)}', space=vmem, size = 0x12000, scoped, tag = 'internal scratch']
  %s0 = inlined_call_operand.vmem [shape: bf16[8,1024], index: 0, kind: input, shape index: {}]
  %s1 = inlined_call_operand.hbm [shape: bf16[1024,128], index: 1, kind: input, shape index: {}]
  %s2 = inlined_call_operand.vmem [shape: bf16[128,64], index: 2, kind: input, shape index: {}]
  %s3 = inlined_call_operand.vmem [shape: bf16[64,32], index: 3, kind: input, shape index: {}]
  %s4 = inlined_call_operand.vmem [shape: bf16[32,128], index: 4, kind: input, shape index: {}]
  %s5 = inlined_call_operand.vmem [shape: f32[10,128], index: 5, kind: input, shape index: {}]
  %s6 = inlined_call_operand.hbm [shape: f32[8,128], index: 6, kind: output, shape index: {}]
  %s7 = sld [smem:[#allocation0]]
  $region38: #{tpu_custom_call.1} parent=0
    _
  %s9 = ssub.s32 1, %s7
  %s10 = scalar_select 0, %s9, %s7
  $region1: #{tpu_custom_call.1} parent=0
    #allocation2 [shape = 'u8[262144]{0}', space=vmem, size = 0x40000, scoped, tag = 'input window, operand 1, single buffered']
    #allocation3 [shape = 's32[1]{0}', space=sflag, size = 0x4, scoped, tag = 'scoped memory for tpu_custom_call.1']
    #allocation4 [shape = 's32[1]{0}', space=sflag, size = 0x4, scoped, tag = 'scoped memory for tpu_custom_call.1']
    #allocation5 [shape = 'u8[4096]{0}', space=vmem, size = 0x1000, scoped, tag = 'output window, operand 0, single buffered']
    %11 = vsyncpa [#allocation3], 0
    %12 = vsyncpa [#allocation4], 0
    // Predicated region
    $region2: #{tpu_custom_call.1} parent=1 // pred_check
      _
    $region3: #{tpu_custom_call.1} parent=1 // pred_check_branch
      %14 = sbr.rel (0) target = $region5
    $region4: #{tpu_custom_call.1} parent=1 // pred_region
      _
    $region5: #{tpu_custom_call.1} parent=1 // pred_fallthru
      _
    // Predicated region
    $region6: #{tpu_custom_call.1} parent=1 // pred_check
      _
    $region7: #{tpu_custom_call.1} parent=1 // pred_check_branch
      %16 = sbr.rel (0) target = $region9
    $region8: #{tpu_custom_call.1} parent=1 // pred_region
      %s18 = ssub.s32 8192, 8192
      %19 = vsyncadd [#allocation3], %s18
      %s20 = sshll.u32 [#allocation2], 4
      %s21 = int_to_ptr.vmem [resolvable:$true] %s20
      %26 = dma.hbm_to_vmem [thread:$0]  %s1, 8192, %s21, [#allocation3], 64, 64, 4
    $region9: #{tpu_custom_call.1} parent=1 // pred_fallthru
      _
    // Predicated region
    $region10: #{tpu_custom_call.1} parent=1 // pred_check
      _
    $region11: #{tpu_custom_call.1} parent=1 // pred_check_branch
      %28 = sbr.rel (0) target = $region13
    $region12: #{tpu_custom_call.1} parent=1 // pred_region
      _
    $region13: #{tpu_custom_call.1} parent=1 // pred_fallthru
      _
    // Predicated region
    $region14: #{tpu_custom_call.1} parent=1 // pred_check
      _
    $region15: #{tpu_custom_call.1} parent=1 // pred_check_branch
      %30 = sbr.rel (0) target = $region17
    $region16: #{tpu_custom_call.1} parent=1 // pred_region
      _
    $region17: #{tpu_custom_call.1} parent=1 // pred_fallthru
      _
    // Predicated region
    $region18: #{tpu_custom_call.1} parent=1 // pred_check
      _
    $region19: #{tpu_custom_call.1} parent=1 // pred_check_branch
      %32 = sbr.rel (0) target = $region21
    $region20: #{tpu_custom_call.1} parent=1 // pred_region
      _
    $region21: #{tpu_custom_call.1} parent=1 // pred_fallthru
      _
    // Predicated region
    $region22: #{tpu_custom_call.1} parent=1 // pred_check
      _
    $region23: #{tpu_custom_call.1} parent=1 // pred_check_branch
      %34 = sbr.rel (0) target = $region25
    $region24: #{tpu_custom_call.1} parent=1 // pred_region
      _
    $region25: #{tpu_custom_call.1} parent=1 // pred_fallthru
      _
    // Predicated region
    $region26: #{tpu_custom_call.1} parent=1 // pred_check
      _
    $region27: #{tpu_custom_call.1} parent=1 // pred_check_branch
      %36 = sbr.rel (0) target = $region29
    $region28: #{tpu_custom_call.1} parent=1 // pred_region
      %37 = dma.done [#allocation3], 8192
    $region29: #{tpu_custom_call.1} parent=1 // pred_fallthru
      _
    %v39 = vld [vmem:[%s0] sm:$0xff]
    %v40 = vld [vmem:[%s0 + $0x8] sm:$0xff]
    %v41 = vld [vmem:[%s0 + $0x10] sm:$0xff]
    %v42 = vld [vmem:[%s0 + $0x18] sm:$0xff]
    %v43 = vld [vmem:[%s5] sm:$0x1]
    %v44 = vld [vmem:[%s5 + $0x1] sm:$0x1]
    %v45 = vld [vmem:[%s5 + $0x2] sm:$0x1]
    %v46 = vld [vmem:[#allocation2] sm:$0xf]
    %v47 = vld [vmem:[#allocation2 + $0x4] sm:$0xf]
    %v48 = vld [vmem:[#allocation2 + $0x8] sm:$0xf]
    %v49 = vld [vmem:[#allocation2 + $0xc] sm:$0xf]
    %v50 = vld [vmem:[#allocation2 + $0x10] sm:$0xf]
    %v51 = vld [vmem:[#allocation2 + $0x14] sm:$0xf]
    %v52 = vld [vmem:[#allocation2 + $0x18] sm:$0xf]
    %v53 = vld [vmem:[#allocation2 + $0x1c] sm:$0xf]
    %v54 = vld [vmem:[#allocation2 + $0x20] sm:$0xf]
    %v55 = vld [vmem:[#allocation2 + $0x24] sm:$0xf]
    %v56 = vld [vmem:[#allocation2 + $0x28] sm:$0xf]
    %v57 = vld [vmem:[#allocation2 + $0x2c] sm:$0xf]
    %v58 = vld [vmem:[#allocation2 + $0x30] sm:$0xf]
    %v59 = vld [vmem:[#allocation2 + $0x34] sm:$0xf]
    %v60 = vld [vmem:[#allocation2 + $0x38] sm:$0xf]
    %v61 = vld [vmem:[#allocation2 + $0x3c] sm:$0xf]
    %v62 = vld [vmem:[#allocation2 + $0x40] sm:$0xf]
    %v63 = vld [vmem:[#allocation2 + $0x44] sm:$0xf]
    %v64 = vld [vmem:[#allocation2 + $0x48] sm:$0xf]
    %v65 = vld [vmem:[#allocation2 + $0x4c] sm:$0xf]
    %v66 = vld [vmem:[#allocation2 + $0x50] sm:$0xf]
    %v67 = vld [vmem:[#allocation2 + $0x54] sm:$0xf]
    %v68 = vld [vmem:[#allocation2 + $0x58] sm:$0xf]
    %v69 = vld [vmem:[#allocation2 + $0x5c] sm:$0xf]
    %v70 = vld [vmem:[#allocation2 + $0x60] sm:$0xf]
    %v71 = vld [vmem:[#allocation2 + $0x64] sm:$0xf]
    %v72 = vld [vmem:[#allocation2 + $0x68] sm:$0xf]
    %v73 = vld [vmem:[#allocation2 + $0x6c] sm:$0xf]
    %v74 = vld [vmem:[#allocation2 + $0x70] sm:$0xf]
    %v75 = vld [vmem:[#allocation2 + $0x74] sm:$0xf]
    %v76 = vld [vmem:[#allocation2 + $0x78] sm:$0xf]
    %v77 = vld [vmem:[#allocation2 + $0x7c] sm:$0xf]
    %v78 = vld [vmem:[#allocation2 + $0x80] sm:$0xf]
    %v79 = vld [vmem:[#allocation2 + $0x84] sm:$0xf]
    %v80 = vld [vmem:[#allocation2 + $0x88] sm:$0xf]
    %v81 = vld [vmem:[#allocation2 + $0x8c] sm:$0xf]
    %v82 = vld [vmem:[#allocation2 + $0x90] sm:$0xf]
    %v83 = vld [vmem:[#allocation2 + $0x94] sm:$0xf]
    %v84 = vld [vmem:[#allocation2 + $0x98] sm:$0xf]
    %v85 = vld [vmem:[#allocation2 + $0x9c] sm:$0xf]
    %v86 = vld [vmem:[#allocation2 + $0xa0] sm:$0xf]
    %v87 = vld [vmem:[#allocation2 + $0xa4] sm:$0xf]
    %v88 = vld [vmem:[#allocation2 + $0xa8] sm:$0xf]
    %v89 = vld [vmem:[#allocation2 + $0xac] sm:$0xf]
    %v90 = vld [vmem:[#allocation2 + $0xb0] sm:$0xf]
    %v91 = vld [vmem:[#allocation2 + $0xb4] sm:$0xf]
    %v92 = vld [vmem:[#allocation2 + $0xb8] sm:$0xf]
    %v93 = vld [vmem:[#allocation2 + $0xbc] sm:$0xf]
    %v94 = vld [vmem:[#allocation2 + $0xc0] sm:$0xf]
    %v95 = vld [vmem:[#allocation2 + $0xc4] sm:$0xf]
    %v96 = vld [vmem:[#allocation2 + $0xc8] sm:$0xf]
    %v97 = vld [vmem:[#allocation2 + $0xcc] sm:$0xf]
    %v98 = vld [vmem:[#allocation2 + $0xd0] sm:$0xf]
    %v99 = vld [vmem:[#allocation2 + $0xd4] sm:$0xf]
    %v100 = vld [vmem:[#allocation2 + $0xd8] sm:$0xf]
    %v101 = vld [vmem:[#allocation2 + $0xdc] sm:$0xf]
    %v102 = vld [vmem:[#allocation2 + $0xe0] sm:$0xf]
    %v103 = vld [vmem:[#allocation2 + $0xe4] sm:$0xf]
    %v104 = vld [vmem:[#allocation2 + $0xe8] sm:$0xf]
    %v105 = vld [vmem:[#allocation2 + $0xec] sm:$0xf]
    %v106 = vld [vmem:[#allocation2 + $0xf0] sm:$0xf]
    %v107 = vld [vmem:[#allocation2 + $0xf4] sm:$0xf]
    %v108 = vld [vmem:[#allocation2 + $0xf8] sm:$0xf]
    %v109 = vld [vmem:[#allocation2 + $0xfc] sm:$0xf]
    %v110 = vld [vmem:[#allocation2 + $0x100] sm:$0xf]
    %v111 = vld [vmem:[#allocation2 + $0x104] sm:$0xf]
    %v112 = vld [vmem:[#allocation2 + $0x108] sm:$0xf]
    %v113 = vld [vmem:[#allocation2 + $0x10c] sm:$0xf]
    %v114 = vld [vmem:[#allocation2 + $0x110] sm:$0xf]
    %v115 = vld [vmem:[#allocation2 + $0x114] sm:$0xf]
    %v116 = vld [vmem:[#allocation2 + $0x118] sm:$0xf]
    %v117 = vld [vmem:[#allocation2 + $0x11c] sm:$0xf]
    %v118 = vld [vmem:[#allocation2 + $0x120] sm:$0xf]
    %v119 = vld [vmem:[#allocation2 + $0x124] sm:$0xf]
    %v120 = vld [vmem:[#allocation2 + $0x128] sm:$0xf]
    %v121 = vld [vmem:[#allocation2 + $0x12c] sm:$0xf]
    %v122 = vld [vmem:[#allocation2 + $0x130] sm:$0xf]
    %v123 = vld [vmem:[#allocation2 + $0x134] sm:$0xf]
    %v124 = vld [vmem:[#allocation2 + $0x138] sm:$0xf]
    %v125 = vld [vmem:[#allocation2 + $0x13c] sm:$0xf]
    %v126 = vld [vmem:[#allocation2 + $0x140] sm:$0xf]
    %v127 = vld [vmem:[#allocation2 + $0x144] sm:$0xf]
    %v128 = vld [vmem:[#allocation2 + $0x148] sm:$0xf]
    %v129 = vld [vmem:[#allocation2 + $0x14c] sm:$0xf]
    %v130 = vld [vmem:[#allocation2 + $0x150] sm:$0xf]
    %v131 = vld [vmem:[#allocation2 + $0x154] sm:$0xf]
    %v132 = vld [vmem:[#allocation2 + $0x158] sm:$0xf]
    %v133 = vld [vmem:[#allocation2 + $0x15c] sm:$0xf]
    %v134 = vld [vmem:[#allocation2 + $0x160] sm:$0xf]
    %v135 = vld [vmem:[#allocation2 + $0x164] sm:$0xf]
    %v136 = vld [vmem:[#allocation2 + $0x168] sm:$0xf]
    %v137 = vld [vmem:[#allocation2 + $0x16c] sm:$0xf]
    %v138 = vld [vmem:[#allocation2 + $0x170] sm:$0xf]
    %v139 = vld [vmem:[#allocation2 + $0x174] sm:$0xf]
    %v140 = vld [vmem:[#allocation2 + $0x178] sm:$0xf]
    %v141 = vld [vmem:[#allocation2 + $0x17c] sm:$0xf]
    %v142 = vld [vmem:[#allocation2 + $0x180] sm:$0xf]
    %v143 = vld [vmem:[#allocation2 + $0x184] sm:$0xf]
    %v144 = vld [vmem:[#allocation2 + $0x188] sm:$0xf]
    %v145 = vld [vmem:[#allocation2 + $0x18c] sm:$0xf]
    %v146 = vld [vmem:[#allocation2 + $0x190] sm:$0xf]
    %v147 = vld [vmem:[#allocation2 + $0x194] sm:$0xf]
    %v148 = vld [vmem:[#allocation2 + $0x198] sm:$0xf]
    %v149 = vld [vmem:[#allocation2 + $0x19c] sm:$0xf]
    %v150 = vld [vmem:[#allocation2 + $0x1a0] sm:$0xf]
    %v151 = vld [vmem:[#allocation2 + $0x1a4] sm:$0xf]
    %v152 = vld [vmem:[#allocation2 + $0x1a8] sm:$0xf]
    %v153 = vld [vmem:[#allocation2 + $0x1ac] sm:$0xf]
    %v154 = vld [vmem:[#allocation2 + $0x1b0] sm:$0xf]
    %v155 = vld [vmem:[#allocation2 + $0x1b4] sm:$0xf]
    %v156 = vld [vmem:[#allocation2 + $0x1b8] sm:$0xf]
    %v157 = vld [vmem:[#allocation2 + $0x1bc] sm:$0xf]
    %v158 = vld [vmem:[#allocation2 + $0x1c0] sm:$0xf]
    %v159 = vld [vmem:[#allocation2 + $0x1c4] sm:$0xf]
    %v160 = vld [vmem:[#allocation2 + $0x1c8] sm:$0xf]
    %v161 = vld [vmem:[#allocation2 + $0x1cc] sm:$0xf]
    %v162 = vld [vmem:[#allocation2 + $0x1d0] sm:$0xf]
    %v163 = vld [vmem:[#allocation2 + $0x1d4] sm:$0xf]
    %v164 = vld [vmem:[#allocation2 + $0x1d8] sm:$0xf]
    %v165 = vld [vmem:[#allocation2 + $0x1dc] sm:$0xf]
    %v166 = vld [vmem:[#allocation2 + $0x1e0] sm:$0xf]
    %v167 = vld [vmem:[#allocation2 + $0x1e4] sm:$0xf]
    %v168 = vld [vmem:[#allocation2 + $0x1e8] sm:$0xf]
    %v169 = vld [vmem:[#allocation2 + $0x1ec] sm:$0xf]
    %v170 = vld [vmem:[#allocation2 + $0x1f0] sm:$0xf]
    %v171 = vld [vmem:[#allocation2 + $0x1f4] sm:$0xf]
    %v172 = vld [vmem:[#allocation2 + $0x1f8] sm:$0xf]
    %v173 = vld [vmem:[#allocation2 + $0x1fc] sm:$0xf]
    %v174 = vlaneseq
    %v175 = vshrl.u32 %v174, 7
    %v176 = vsub.s32 0, %v175
    %v177 = vrot.slane %v43, %v176
    %v182 = vunpack.c.l.b16 %v39
    %v183 = vunpack.c.h.b16 %v39
    %v184 = vunpack.c.l.b16 %v40
    %v185 = vunpack.c.h.b16 %v40
    %v186 = vunpack.c.l.b16 %v41
    %v187 = vunpack.c.h.b16 %v41
    %v188 = vunpack.c.l.b16 %v42
    %v189 = vunpack.c.h.b16 %v42
    %v190 = vpack.c.b16 %v182, %v182
    %v191 = vpack.c.b16 %v183, %v183
    %v192 = vpack.c.b16 %v184, %v184
    %v193 = vpack.c.b16 %v185, %v185
    %v194 = vpack.c.b16 %v186, %v186
    %v195 = vpack.c.b16 %v187, %v187
    %v196 = vpack.c.b16 %v188, %v188
    %v197 = vpack.c.b16 %v189, %v189
    %v334 = vunpack.c.l.b16 %v46
    %v335 = vunpack.c.l.b16 %v47
    %v336 = vunpack.c.l.b16 %v48
    %v337 = vunpack.c.l.b16 %v49
    %v338 = vunpack.c.l.b16 %v50
    %v339 = vunpack.c.l.b16 %v51
    %v340 = vunpack.c.l.b16 %v52
    %v341 = vunpack.c.l.b16 %v53
    %v342 = vunpack.c.l.b16 %v54
    %v343 = vunpack.c.l.b16 %v55
    %v344 = vunpack.c.l.b16 %v56
    %v345 = vunpack.c.l.b16 %v57
    %v346 = vunpack.c.l.b16 %v58
    %v347 = vunpack.c.l.b16 %v59
    %v348 = vunpack.c.l.b16 %v60
    %v349 = vunpack.c.l.b16 %v61
    %v350 = vunpack.c.l.b16 %v62
    %v351 = vunpack.c.l.b16 %v63
    %v352 = vunpack.c.l.b16 %v64
    %v353 = vunpack.c.l.b16 %v65
    %v354 = vunpack.c.l.b16 %v66
    %v355 = vunpack.c.l.b16 %v67
    %v356 = vunpack.c.l.b16 %v68
    %v357 = vunpack.c.l.b16 %v69
    %v358 = vunpack.c.l.b16 %v70
    %v359 = vunpack.c.l.b16 %v71
    %v360 = vunpack.c.l.b16 %v72
    %v361 = vunpack.c.l.b16 %v73
    %v362 = vunpack.c.l.b16 %v74
    %v363 = vunpack.c.l.b16 %v75
    %v364 = vunpack.c.l.b16 %v76
    %v365 = vunpack.c.l.b16 %v77
    %v366 = vunpack.c.l.b16 %v78
    %v367 = vunpack.c.l.b16 %v79
    %v368 = vunpack.c.l.b16 %v80
    %v369 = vunpack.c.l.b16 %v81
    %v370 = vunpack.c.l.b16 %v82
    %v371 = vunpack.c.l.b16 %v83
    %v372 = vunpack.c.l.b16 %v84
    %v373 = vunpack.c.l.b16 %v85
    %v374 = vunpack.c.l.b16 %v86
    %v375 = vunpack.c.l.b16 %v87
    %v376 = vunpack.c.l.b16 %v88
    %v377 = vunpack.c.l.b16 %v89
    %v378 = vunpack.c.l.b16 %v90
    %v379 = vunpack.c.l.b16 %v91
    %v380 = vunpack.c.l.b16 %v92
    %v381 = vunpack.c.l.b16 %v93
    %v382 = vunpack.c.l.b16 %v94
    %v383 = vunpack.c.l.b16 %v95
    %v384 = vunpack.c.l.b16 %v96
    %v385 = vunpack.c.l.b16 %v97
    %v386 = vunpack.c.l.b16 %v98
    %v387 = vunpack.c.l.b16 %v99
    %v388 = vunpack.c.l.b16 %v100
    %v389 = vunpack.c.l.b16 %v101
    %v390 = vunpack.c.l.b16 %v102
    %v391 = vunpack.c.l.b16 %v103
    %v392 = vunpack.c.l.b16 %v104
    %v393 = vunpack.c.l.b16 %v105
    %v394 = vunpack.c.l.b16 %v106
    %v395 = vunpack.c.l.b16 %v107
    %v396 = vunpack.c.l.b16 %v108
    %v397 = vunpack.c.l.b16 %v109
    %v398 = vunpack.c.l.b16 %v110
    %v399 = vunpack.c.l.b16 %v111
    %v400 = vunpack.c.l.b16 %v112
    %v401 = vunpack.c.l.b16 %v113
    %v402 = vunpack.c.l.b16 %v114
    %v403 = vunpack.c.l.b16 %v115
    %v404 = vunpack.c.l.b16 %v116
    %v405 = vunpack.c.l.b16 %v117
    %v406 = vunpack.c.l.b16 %v118
    %v407 = vunpack.c.l.b16 %v119
    %v408 = vunpack.c.l.b16 %v120
    %v409 = vunpack.c.l.b16 %v121
    %v410 = vunpack.c.l.b16 %v122
    %v411 = vunpack.c.l.b16 %v123
    %v412 = vunpack.c.l.b16 %v124
    %v413 = vunpack.c.l.b16 %v125
    %v414 = vunpack.c.l.b16 %v126
    %v415 = vunpack.c.l.b16 %v127
    %v416 = vunpack.c.l.b16 %v128
    %v417 = vunpack.c.l.b16 %v129
    %v418 = vunpack.c.l.b16 %v130
    %v419 = vunpack.c.l.b16 %v131
    %v420 = vunpack.c.l.b16 %v132
    %v421 = vunpack.c.l.b16 %v133
    %v422 = vunpack.c.l.b16 %v134
    %v423 = vunpack.c.l.b16 %v135
    %v424 = vunpack.c.l.b16 %v136
    %v425 = vunpack.c.l.b16 %v137
    %v426 = vunpack.c.l.b16 %v138
    %v427 = vunpack.c.l.b16 %v139
    %v428 = vunpack.c.l.b16 %v140
    %v429 = vunpack.c.l.b16 %v141
    %v430 = vunpack.c.l.b16 %v142
    %v431 = vunpack.c.l.b16 %v143
    %v432 = vunpack.c.l.b16 %v144
    %v433 = vunpack.c.l.b16 %v145
    %v434 = vunpack.c.l.b16 %v146
    %v435 = vunpack.c.l.b16 %v147
    %v436 = vunpack.c.l.b16 %v148
    %v437 = vunpack.c.l.b16 %v149
    %v438 = vunpack.c.l.b16 %v150
    %v439 = vunpack.c.l.b16 %v151
    %v440 = vunpack.c.l.b16 %v152
    %v441 = vunpack.c.l.b16 %v153
    %v442 = vunpack.c.l.b16 %v154
    %v443 = vunpack.c.l.b16 %v155
    %v444 = vunpack.c.l.b16 %v156
    %v445 = vunpack.c.l.b16 %v157
    %v446 = vunpack.c.l.b16 %v158
    %v447 = vunpack.c.l.b16 %v159
    %v448 = vunpack.c.l.b16 %v160
    %v449 = vunpack.c.l.b16 %v161
    %v450 = vunpack.c.l.b16 %v162
    %v451 = vunpack.c.l.b16 %v163
    %v452 = vunpack.c.l.b16 %v164
    %v453 = vunpack.c.l.b16 %v165
    %v454 = vunpack.c.l.b16 %v166
    %v455 = vunpack.c.l.b16 %v167
    %v456 = vunpack.c.l.b16 %v168
    %v457 = vunpack.c.l.b16 %v169
    %v458 = vunpack.c.l.b16 %v170
    %v459 = vunpack.c.l.b16 %v171
    %v460 = vunpack.c.l.b16 %v172
    %v461 = vunpack.c.l.b16 %v173
    %v462 = vpack.c.b16 %v335, %v334
    %v463 = vpack.c.b16 %v337, %v336
    %v464 = vpack.c.b16 %v339, %v338
    %v465 = vpack.c.b16 %v341, %v340
    %v466 = vpack.c.b16 %v343, %v342
    %v467 = vpack.c.b16 %v345, %v344
    %v468 = vpack.c.b16 %v347, %v346
    %v469 = vpack.c.b16 %v349, %v348
    %v470 = vpack.c.b16 %v351, %v350
    %v471 = vpack.c.b16 %v353, %v352
    %v472 = vpack.c.b16 %v355, %v354
    %v473 = vpack.c.b16 %v357, %v356
    %v474 = vpack.c.b16 %v359, %v358
    %v475 = vpack.c.b16 %v361, %v360
    %v476 = vpack.c.b16 %v363, %v362
    %v477 = vpack.c.b16 %v365, %v364
    %v478 = vpack.c.b16 %v367, %v366
    %v479 = vpack.c.b16 %v369, %v368
    %v480 = vpack.c.b16 %v371, %v370
    %v481 = vpack.c.b16 %v373, %v372
    %v482 = vpack.c.b16 %v375, %v374
    %v483 = vpack.c.b16 %v377, %v376
    %v484 = vpack.c.b16 %v379, %v378
    %v485 = vpack.c.b16 %v381, %v380
    %v486 = vpack.c.b16 %v383, %v382
    %v487 = vpack.c.b16 %v385, %v384
    %v488 = vpack.c.b16 %v387, %v386
    %v489 = vpack.c.b16 %v389, %v388
    %v490 = vpack.c.b16 %v391, %v390
    %v491 = vpack.c.b16 %v393, %v392
    %v492 = vpack.c.b16 %v395, %v394
    %v493 = vpack.c.b16 %v397, %v396
    %v494 = vpack.c.b16 %v399, %v398
    %v495 = vpack.c.b16 %v401, %v400
    %v496 = vpack.c.b16 %v403, %v402
    %v497 = vpack.c.b16 %v405, %v404
    %v498 = vpack.c.b16 %v407, %v406
    %v499 = vpack.c.b16 %v409, %v408
    %v500 = vpack.c.b16 %v411, %v410
    %v501 = vpack.c.b16 %v413, %v412
    %v502 = vpack.c.b16 %v415, %v414
    %v503 = vpack.c.b16 %v417, %v416
    %v504 = vpack.c.b16 %v419, %v418
    %v505 = vpack.c.b16 %v421, %v420
    %v506 = vpack.c.b16 %v423, %v422
    %v507 = vpack.c.b16 %v425, %v424
    %v508 = vpack.c.b16 %v427, %v426
    %v509 = vpack.c.b16 %v429, %v428
    %v510 = vpack.c.b16 %v431, %v430
    %v511 = vpack.c.b16 %v433, %v432
    %v512 = vpack.c.b16 %v435, %v434
    %v513 = vpack.c.b16 %v437, %v436
    %v514 = vpack.c.b16 %v439, %v438
    %v515 = vpack.c.b16 %v441, %v440
    %v516 = vpack.c.b16 %v443, %v442
    %v517 = vpack.c.b16 %v445, %v444
    %v518 = vpack.c.b16 %v447, %v446
    %v519 = vpack.c.b16 %v449, %v448
    %v520 = vpack.c.b16 %v451, %v450
    %v521 = vpack.c.b16 %v453, %v452
    %v522 = vpack.c.b16 %v455, %v454
    %v523 = vpack.c.b16 %v457, %v456
    %v524 = vpack.c.b16 %v459, %v458
    %v525 = vpack.c.b16 %v461, %v460
    %590 = vmatprep.subr.bf16.mxu0 0
    %591 = vmatpush1.bf16.msra.mxu0 %v462
    %592 = vmatprep.subr.bf16.mxu0 0
    %593 = vmatpush1.bf16.msra.mxu0 %v463
    %594 = vmatprep.subr.bf16.mxu0 0
    %595 = vmatpush1.bf16.msra.mxu0 %v464
    %596 = vmatprep.subr.bf16.mxu0 0
    %597 = vmatpush1.bf16.msra.mxu0 %v465
    %598 = vmatprep.subr.bf16.mxu0 0
    %599 = vmatpush1.bf16.msra.mxu0 %v466
    %600 = vmatprep.subr.bf16.mxu0 0
    %601 = vmatpush1.bf16.msra.mxu0 %v467
    %602 = vmatprep.subr.bf16.mxu0 0
    %603 = vmatpush1.bf16.msra.mxu0 %v468
    %604 = vmatprep.subr.bf16.mxu0 0
    %605 = vmatpush1.bf16.msra.mxu0 %v469
    %606 = vmatprep.subr.bf16.mxu0 0
    %607 = vmatpush1.bf16.msra.mxu0 %v470
    %608 = vmatprep.subr.bf16.mxu0 0
    %609 = vmatpush1.bf16.msra.mxu0 %v471
    %610 = vmatprep.subr.bf16.mxu0 0
    %611 = vmatpush1.bf16.msra.mxu0 %v472
    %612 = vmatprep.subr.bf16.mxu0 0
    %613 = vmatpush1.bf16.msra.mxu0 %v473
    %614 = vmatprep.subr.bf16.mxu0 0
    %615 = vmatpush1.bf16.msra.mxu0 %v474
    %616 = vmatprep.subr.bf16.mxu0 0
    %617 = vmatpush1.bf16.msra.mxu0 %v475
    %618 = vmatprep.subr.bf16.mxu0 0
    %619 = vmatpush1.bf16.msra.mxu0 %v476
    %620 = vmatprep.subr.bf16.mxu0 0
    %621 = vmatpush1.bf16.msra.mxu0 %v477
    %622 = vmatprep.mubr.bf16.mxu0 %v191
    %623 = vmatmul.mubr.bf16.gmra.mrb[0].mxu0 %v190
    %v624 = vpop.f32.mrb[0].mxu0
    %v625 = vadd.f32 %v177, %v624
    %v626 = vpop.f32.mrb[0].mxu0
    %v627 = vpop.f32.mrb[0].mxu0
    %v628 = vpop.f32.mrb[0].mxu0
    %629 = vdwg.mxu0
    %630 = vmatprep.subr.bf16.mxu0 0
    %631 = vmatpush1.bf16.msra.mxu0 %v478
    %632 = vmatprep.subr.bf16.mxu0 0
    %633 = vmatpush1.bf16.msra.mxu0 %v479
    %634 = vmatprep.subr.bf16.mxu0 0
    %635 = vmatpush1.bf16.msra.mxu0 %v480
    %636 = vmatprep.subr.bf16.mxu0 0
    %637 = vmatpush1.bf16.msra.mxu0 %v481
    %638 = vmatprep.subr.bf16.mxu0 0
    %639 = vmatpush1.bf16.msra.mxu0 %v482
    %640 = vmatprep.subr.bf16.mxu0 0
    %641 = vmatpush1.bf16.msra.mxu0 %v483
    %642 = vmatprep.subr.bf16.mxu0 0
    %643 = vmatpush1.bf16.msra.mxu0 %v484
    %644 = vmatprep.subr.bf16.mxu0 0
    %645 = vmatpush1.bf16.msra.mxu0 %v485
    %646 = vmatprep.subr.bf16.mxu0 0
    %647 = vmatpush1.bf16.msra.mxu0 %v486
    %648 = vmatprep.subr.bf16.mxu0 0
    %649 = vmatpush1.bf16.msra.mxu0 %v487
    %650 = vmatprep.subr.bf16.mxu0 0
    %651 = vmatpush1.bf16.msra.mxu0 %v488
    %652 = vmatprep.subr.bf16.mxu0 0
    %653 = vmatpush1.bf16.msra.mxu0 %v489
    %654 = vmatprep.subr.bf16.mxu0 0
    %655 = vmatpush1.bf16.msra.mxu0 %v490
    %656 = vmatprep.subr.bf16.mxu0 0
    %657 = vmatpush1.bf16.msra.mxu0 %v491
    %658 = vmatprep.subr.bf16.mxu0 0
    %659 = vmatpush1.bf16.msra.mxu0 %v492
    %660 = vmatprep.subr.bf16.mxu0 0
    %661 = vmatpush1.bf16.msra.mxu0 %v493
    %662 = vmatprep.mubr.bf16.mxu0 %v193
    %663 = vmatmul.mubr.bf16.gmra.mrb[0].mxu0 %v192
    %v664 = vpop.f32.mrb[0].mxu0
    %v665 = vadd.f32 %v625, %v664
    %v666 = vpop.f32.mrb[0].mxu0
    %v667 = vpop.f32.mrb[0].mxu0
    %v668 = vpop.f32.mrb[0].mxu0
    %669 = vdwg.mxu0
    %670 = vmatprep.subr.bf16.mxu0 0
    %671 = vmatpush1.bf16.msra.mxu0 %v494
    %672 = vmatprep.subr.bf16.mxu0 0
    %673 = vmatpush1.bf16.msra.mxu0 %v495
    %674 = vmatprep.subr.bf16.mxu0 0
    %675 = vmatpush1.bf16.msra.mxu0 %v496
    %676 = vmatprep.subr.bf16.mxu0 0
    %677 = vmatpush1.bf16.msra.mxu0 %v497
    %678 = vmatprep.subr.bf16.mxu0 0
    %679 = vmatpush1.bf16.msra.mxu0 %v498
    %680 = vmatprep.subr.bf16.mxu0 0
    %681 = vmatpush1.bf16.msra.mxu0 %v499
    %682 = vmatprep.subr.bf16.mxu0 0
    %683 = vmatpush1.bf16.msra.mxu0 %v500
    %684 = vmatprep.subr.bf16.mxu0 0
    %685 = vmatpush1.bf16.msra.mxu0 %v501
    %686 = vmatprep.subr.bf16.mxu0 0
    %687 = vmatpush1.bf16.msra.mxu0 %v502
    %688 = vmatprep.subr.bf16.mxu0 0
    %689 = vmatpush1.bf16.msra.mxu0 %v503
    %690 = vmatprep.subr.bf16.mxu0 0
    %691 = vmatpush1.bf16.msra.mxu0 %v504
    %692 = vmatprep.subr.bf16.mxu0 0
    %693 = vmatpush1.bf16.msra.mxu0 %v505
    %694 = vmatprep.subr.bf16.mxu0 0
    %695 = vmatpush1.bf16.msra.mxu0 %v506
    %696 = vmatprep.subr.bf16.mxu0 0
    %697 = vmatpush1.bf16.msra.mxu0 %v507
    %698 = vmatprep.subr.bf16.mxu0 0
    %699 = vmatpush1.bf16.msra.mxu0 %v508
    %700 = vmatprep.subr.bf16.mxu0 0
    %701 = vmatpush1.bf16.msra.mxu0 %v509
    %702 = vmatprep.mubr.bf16.mxu0 %v195
    %703 = vmatmul.mubr.bf16.gmra.mrb[0].mxu0 %v194
    %v704 = vpop.f32.mrb[0].mxu0
    %v705 = vadd.f32 %v665, %v704
    %v706 = vpop.f32.mrb[0].mxu0
    %v707 = vpop.f32.mrb[0].mxu0
    %v708 = vpop.f32.mrb[0].mxu0
    %709 = vdwg.mxu0
    %710 = vmatprep.subr.bf16.mxu0 0
    %711 = vmatpush1.bf16.msra.mxu0 %v510
    %712 = vmatprep.subr.bf16.mxu0 0
    %713 = vmatpush1.bf16.msra.mxu0 %v511
    %714 = vmatprep.subr.bf16.mxu0 0
    %715 = vmatpush1.bf16.msra.mxu0 %v512
    %716 = vmatprep.subr.bf16.mxu0 0
    %717 = vmatpush1.bf16.msra.mxu0 %v513
    %718 = vmatprep.subr.bf16.mxu0 0
    %719 = vmatpush1.bf16.msra.mxu0 %v514
    %720 = vmatprep.subr.bf16.mxu0 0
    %721 = vmatpush1.bf16.msra.mxu0 %v515
    %722 = vmatprep.subr.bf16.mxu0 0
    %723 = vmatpush1.bf16.msra.mxu0 %v516
    %724 = vmatprep.subr.bf16.mxu0 0
    %725 = vmatpush1.bf16.msra.mxu0 %v517
    %726 = vmatprep.subr.bf16.mxu0 0
    %727 = vmatpush1.bf16.msra.mxu0 %v518
    %728 = vmatprep.subr.bf16.mxu0 0
    %729 = vmatpush1.bf16.msra.mxu0 %v519
    %730 = vmatprep.subr.bf16.mxu0 0
    %731 = vmatpush1.bf16.msra.mxu0 %v520
    %732 = vmatprep.subr.bf16.mxu0 0
    %733 = vmatpush1.bf16.msra.mxu0 %v521
    %734 = vmatprep.subr.bf16.mxu0 0
    %735 = vmatpush1.bf16.msra.mxu0 %v522
    %736 = vmatprep.subr.bf16.mxu0 0
    %737 = vmatpush1.bf16.msra.mxu0 %v523
    %738 = vmatprep.subr.bf16.mxu0 0
    %739 = vmatpush1.bf16.msra.mxu0 %v524
    %740 = vmatprep.subr.bf16.mxu0 0
    %741 = vmatpush1.bf16.msra.mxu0 %v525
    %742 = vmatprep.mubr.bf16.mxu0 %v197
    %743 = vmatmul.mubr.bf16.gmra.mrb[0].mxu0 %v196
    %v744 = vpop.f32.mrb[0].mxu0
    %v745 = vadd.f32 %v705, %v744
    %v746 = vpop.f32.mrb[0].mxu0
    %v747 = vpop.f32.mrb[0].mxu0
    %v748 = vpop.f32.mrb[0].mxu0
    %749 = vdwg.mxu0
    %750 = vadd.xlane.f32.xlu0 %v745
    %v751 = vpop.xlane.xlu0 %750
    %v752 = vrcp.pop 128.0
    %v753 = vmul.f32 %v751, %v752
    %v754 = vmul.f32 %v745, %v745
    %755 = vadd.xlane.f32.xlu0 %v754
    %v756 = vpop.xlane.xlu0 %755
    %v757 = vmul.f32 %v756, %v752
    %v758 = vmul.f32 %v753, %v753
    %v759 = vsub.f32 %v757, %v758
    %v760 = vmax.f32 %v759, 0.0
    %v761 = vsub.f32 %v745, %v753
    %v762 = vadd.f32 %v760, 1e-05
    %v763 = vrsqrt.pop %v762
    %v764 = vmul.f32 %v761, %v763
    %v765 = vlaneseq
    %v766 = vshrl.u32 %v765, 7
    %v767 = vsub.s32 0, %v766
    %v768 = vrot.slane %v44, %v767
    %v769 = vmul.f32 %v764, %v768
    %v770 = vlaneseq
    %v771 = vshrl.u32 %v770, 7
    %v772 = vsub.s32 0, %v771
    %v773 = vrot.slane %v45, %v772
    %v774 = vadd.f32 %v769, %v773
    %vm775 = vcmp.ge.f32.partialorder %v774, 0.0
    %v776 = vmul.f32 %v774, 0.01
    %v777 = vsel %vm775, %v774, %v776
    %v778 = vld [vmem:[%s5 + $0x3] sm:$0x1]
    %v779 = vld [vmem:[%s5 + $0x4] sm:$0x1]
    %v780 = vld [vmem:[%s5 + $0x5] sm:$0x1]
    %v781 = vpack.c.bf16 %v777, %v777
    %v782 = vld [vmem:[%s2] sm:$0xf]
    %v783 = vld [vmem:[%s2 + $0x4] sm:$0xf]
    %v784 = vld [vmem:[%s2 + $0x8] sm:$0xf]
    %v785 = vld [vmem:[%s2 + $0xc] sm:$0xf]
    %v786 = vld [vmem:[%s2 + $0x10] sm:$0xf]
    %v787 = vld [vmem:[%s2 + $0x14] sm:$0xf]
    %v788 = vld [vmem:[%s2 + $0x18] sm:$0xf]
    %v789 = vld [vmem:[%s2 + $0x1c] sm:$0xf]
    %v790 = vld [vmem:[%s2 + $0x20] sm:$0xf]
    %v791 = vld [vmem:[%s2 + $0x24] sm:$0xf]
    %v792 = vld [vmem:[%s2 + $0x28] sm:$0xf]
    %v793 = vld [vmem:[%s2 + $0x2c] sm:$0xf]
    %v794 = vld [vmem:[%s2 + $0x30] sm:$0xf]
    %v795 = vld [vmem:[%s2 + $0x34] sm:$0xf]
    %v796 = vld [vmem:[%s2 + $0x38] sm:$0xf]
    %v797 = vld [vmem:[%s2 + $0x3c] sm:$0xf]
    %v798 = vlaneseq
    %v799 = vshrl.u32 %v798, 7
    %v800 = vsub.s32 0, %v799
    %v801 = vrot.slane %v778, %v800
    %v818 = vunpack.c.l.b16 %v782
    %v819 = vunpack.c.l.b16 %v783
    %v820 = vunpack.c.l.b16 %v784
    %v821 = vunpack.c.l.b16 %v785
    %v822 = vunpack.c.l.b16 %v786
    %v823 = vunpack.c.l.b16 %v787
    %v824 = vunpack.c.l.b16 %v788
    %v825 = vunpack.c.l.b16 %v789
    %v826 = vunpack.c.l.b16 %v790
    %v827 = vunpack.c.l.b16 %v791
    %v828 = vunpack.c.l.b16 %v792
    %v829 = vunpack.c.l.b16 %v793
    %v830 = vunpack.c.l.b16 %v794
    %v831 = vunpack.c.l.b16 %v795
    %v832 = vunpack.c.l.b16 %v796
    %v833 = vunpack.c.l.b16 %v797
    %v834 = vpack.c.b16 %v819, %v818
    %v835 = vpack.c.b16 %v821, %v820
    %v836 = vpack.c.b16 %v823, %v822
    %v837 = vpack.c.b16 %v825, %v824
    %v838 = vpack.c.b16 %v827, %v826
    %v839 = vpack.c.b16 %v829, %v828
    %v840 = vpack.c.b16 %v831, %v830
    %v841 = vpack.c.b16 %v833, %v832
    %850 = vmatprep.subr.bf16.mxu0 0
    %851 = vmatpush1.bf16.msra.mxu0 %v834
    %852 = vmatprep.subr.bf16.mxu0 0
    %853 = vmatpush1.bf16.msra.mxu0 %v835
    %854 = vmatprep.subr.bf16.mxu0 0
    %855 = vmatpush1.bf16.msra.mxu0 %v836
    %856 = vmatprep.subr.bf16.mxu0 0
    %857 = vmatpush1.bf16.msra.mxu0 %v837
    %858 = vmatprep.subr.bf16.mxu0 0
    %859 = vmatpush1.bf16.msra.mxu0 %v838
    %860 = vmatprep.subr.bf16.mxu0 0
    %861 = vmatpush1.bf16.msra.mxu0 %v839
    %862 = vmatprep.subr.bf16.mxu0 0
    %863 = vmatpush1.bf16.msra.mxu0 %v840
    %864 = vmatprep.subr.bf16.mxu0 0
    %865 = vmatpush1.bf16.msra.mxu0 %v841
    %866 = vmatprep.subr.bf16.mxu0 0
    %867 = vmatpush1.bf16.msra.mxu0 0
    %868 = vmatprep.subr.bf16.mxu0 0
    %869 = vmatpush1.bf16.msra.mxu0 0
    %870 = vmatprep.subr.bf16.mxu0 0
    %871 = vmatpush1.bf16.msra.mxu0 0
    %872 = vmatprep.subr.bf16.mxu0 0
    %873 = vmatpush1.bf16.msra.mxu0 0
    %874 = vmatprep.subr.bf16.mxu0 0
    %875 = vmatpush1.bf16.msra.mxu0 0
    %876 = vmatprep.subr.bf16.mxu0 0
    %877 = vmatpush1.bf16.msra.mxu0 0
    %878 = vmatprep.subr.bf16.mxu0 0
    %879 = vmatpush1.bf16.msra.mxu0 0
    %880 = vmatprep.subr.bf16.mxu0 0
    %881 = vmatpush1.bf16.msra.mxu0 0
    %882 = vmatprep.mubr.bf16.mxu0 0
    %883 = vmatmul.mubr.bf16.gmra.mrb[0].mxu0 %v781
    %v884 = vpop.f32.mrb[0].mxu0
    %v885 = vadd.f32 %v801, %v884
    %v886 = vpop.f32.mrb[0].mxu0
    %v887 = vpop.f32.mrb[0].mxu0
    %v888 = vpop.f32.mrb[0].mxu0
    %889 = vdwg.mxu0
    %vm890 = vcmask 523264
    %v891 = vsel %vm890, %v885, 0.0
    %892 = vadd.xlane.f32.xlu0 %v891
    %v893 = vpop.xlane.xlu0 %892
    %v894 = vrcp.pop 64.0
    %v895 = vmul.f32 %v893, %v894
    %v896 = vmul.f32 %v885, %v885
    %v897 = vsel %vm890, %v896, 0.0
    %898 = vadd.xlane.f32.xlu0 %v897
    %v899 = vpop.xlane.xlu0 %898
    %v900 = vmul.f32 %v899, %v894
    %v901 = vmul.f32 %v895, %v895
    %v902 = vsub.f32 %v900, %v901
    %v903 = vmax.f32 %v902, 0.0
    %v904 = vsub.f32 %v885, %v895
    %v905 = vadd.f32 %v903, 1e-05
    %v906 = vrsqrt.pop %v905
    %v907 = vmul.f32 %v904, %v906
    %v908 = vlaneseq
    %v909 = vshrl.u32 %v908, 7
    %v910 = vsub.s32 0, %v909
    %v911 = vrot.slane %v779, %v910
    %v912 = vmul.f32 %v907, %v911
    %v913 = vlaneseq
    %v914 = vshrl.u32 %v913, 7
    %v915 = vsub.s32 0, %v914
    %v916 = vrot.slane %v780, %v915
    %v917 = vadd.f32 %v912, %v916
    %vm918 = vcmp.ge.f32.partialorder %v917, 0.0
    %v919 = vmul.f32 %v917, 0.01
    %v920 = vsel %vm918, %v917, %v919
    %v921 = vld [vmem:[%s5 + $0x6] sm:$0x1]
    %v922 = vld [vmem:[%s5 + $0x7] sm:$0x1]
    %v923 = vld [vmem:[%s5 + $0x8] sm:$0x1]
    %v924 = vpack.c.bf16 %v920, %v920
    %v925 = vld [vmem:[%s3] sm:$0xf]
    %v926 = vld [vmem:[%s3 + $0x4] sm:$0xf]
    %v927 = vld [vmem:[%s3 + $0x8] sm:$0xf]
    %v928 = vld [vmem:[%s3 + $0xc] sm:$0xf]
    %v929 = vld [vmem:[%s3 + $0x10] sm:$0xf]
    %v930 = vld [vmem:[%s3 + $0x14] sm:$0xf]
    %v931 = vld [vmem:[%s3 + $0x18] sm:$0xf]
    %v932 = vld [vmem:[%s3 + $0x1c] sm:$0xf]
    %v933 = vlaneseq
    %v934 = vshrl.u32 %v933, 7
    %v935 = vsub.s32 0, %v934
    %v936 = vrot.slane %v921, %v935
    %v945 = vunpack.c.l.b16 %v925
    %v946 = vunpack.c.l.b16 %v926
    %v947 = vunpack.c.l.b16 %v927
    %v948 = vunpack.c.l.b16 %v928
    %v949 = vunpack.c.l.b16 %v929
    %v950 = vunpack.c.l.b16 %v930
    %v951 = vunpack.c.l.b16 %v931
    %v952 = vunpack.c.l.b16 %v932
    %v953 = vpack.c.b16 %v946, %v945
    %v954 = vpack.c.b16 %v948, %v947
    %v955 = vpack.c.b16 %v950, %v949
    %v956 = vpack.c.b16 %v952, %v951
    %v962 = vsel %vm890, %v924, 0
    %964 = vmatprep.subr.bf16.mxu0 0
    %965 = vmatpush1.bf16.msra.mxu0 %v953
    %966 = vmatprep.subr.bf16.mxu0 0
    %967 = vmatpush1.bf16.msra.mxu0 %v954
    %968 = vmatprep.subr.bf16.mxu0 0
    %969 = vmatpush1.bf16.msra.mxu0 %v955
    %970 = vmatprep.subr.bf16.mxu0 0
    %971 = vmatpush1.bf16.msra.mxu0 %v956
    %972 = vmatprep.subr.bf16.mxu0 0
    %973 = vmatpush1.bf16.msra.mxu0 0
    %974 = vmatprep.subr.bf16.mxu0 0
    %975 = vmatpush1.bf16.msra.mxu0 0
    %976 = vmatprep.subr.bf16.mxu0 0
    %977 = vmatpush1.bf16.msra.mxu0 0
    %978 = vmatprep.subr.bf16.mxu0 0
    %979 = vmatpush1.bf16.msra.mxu0 0
    %980 = vmatprep.subr.bf16.mxu0 0
    %981 = vmatpush1.bf16.msra.mxu0 0
    %982 = vmatprep.subr.bf16.mxu0 0
    %983 = vmatpush1.bf16.msra.mxu0 0
    %984 = vmatprep.subr.bf16.mxu0 0
    %985 = vmatpush1.bf16.msra.mxu0 0
    %986 = vmatprep.subr.bf16.mxu0 0
    %987 = vmatpush1.bf16.msra.mxu0 0
    %988 = vmatprep.subr.bf16.mxu0 0
    %989 = vmatpush1.bf16.msra.mxu0 0
    %990 = vmatprep.subr.bf16.mxu0 0
    %991 = vmatpush1.bf16.msra.mxu0 0
    %992 = vmatprep.subr.bf16.mxu0 0
    %993 = vmatpush1.bf16.msra.mxu0 0
    %994 = vmatprep.subr.bf16.mxu0 0
    %995 = vmatpush1.bf16.msra.mxu0 0
    %996 = vmatprep.mubr.bf16.mxu0 0
    %997 = vmatmul.mubr.bf16.gmra.mrb[0].mxu0 %v962
    %v998 = vpop.f32.mrb[0].mxu0
    %v999 = vadd.f32 %v936, %v998
    %v1000 = vpop.f32.mrb[0].mxu0
    %v1001 = vpop.f32.mrb[0].mxu0
    %v1002 = vpop.f32.mrb[0].mxu0
    %1003 = vdwg.mxu0
    %vm1004 = vcmask 261120
    %v1005 = vsel %vm1004, %v999, 0.0
    %1006 = vadd.xlane.f32.xlu0 %v1005
    %v1007 = vpop.xlane.xlu0 %1006
    %v1008 = vrcp.pop 32.0
    %v1009 = vmul.f32 %v1007, %v1008
    %v1010 = vmul.f32 %v999, %v999
    %v1011 = vsel %vm1004, %v1010, 0.0
    %1012 = vadd.xlane.f32.xlu0 %v1011
    %v1013 = vpop.xlane.xlu0 %1012
    %v1014 = vmul.f32 %v1013, %v1008
    %v1015 = vmul.f32 %v1009, %v1009
    %v1016 = vsub.f32 %v1014, %v1015
    %v1017 = vmax.f32 %v1016, 0.0
    %v1018 = vsub.f32 %v999, %v1009
    %v1019 = vadd.f32 %v1017, 1e-05
    %v1020 = vrsqrt.pop %v1019
    %v1021 = vmul.f32 %v1018, %v1020
    %v1022 = vlaneseq
    %v1023 = vshrl.u32 %v1022, 7
    %v1024 = vsub.s32 0, %v1023
    %v1025 = vrot.slane %v922, %v1024
    %v1026 = vmul.f32 %v1021, %v1025
    %v1027 = vlaneseq
    %v1028 = vshrl.u32 %v1027, 7
    %v1029 = vsub.s32 0, %v1028
    %v1030 = vrot.slane %v923, %v1029
    %v1031 = vadd.f32 %v1026, %v1030
    %vm1032 = vcmp.ge.f32.partialorder %v1031, 0.0
    %v1033 = vmul.f32 %v1031, 0.01
    %v1034 = vsel %vm1032, %v1031, %v1033
    %v1035 = vld [vmem:[%s5 + $0x9] sm:$0x1]
    %v1036 = vpack.c.bf16 %v1034, %v1034
    %v1037 = vld [vmem:[%s4] sm:$0xf]
    %v1038 = vld [vmem:[%s4 + $0x4] sm:$0xf]
    %v1039 = vld [vmem:[%s4 + $0x8] sm:$0xf]
    %v1040 = vld [vmem:[%s4 + $0xc] sm:$0xf]
    %v1041 = vlaneseq
    %v1042 = vshrl.u32 %v1041, 7
    %v1043 = vsub.s32 0, %v1042
    %v1044 = vrot.slane %v1035, %v1043
    %v1049 = vunpack.c.l.b16 %v1037
    %v1050 = vunpack.c.l.b16 %v1038
    %v1051 = vunpack.c.l.b16 %v1039
    %v1052 = vunpack.c.l.b16 %v1040
    %v1053 = vpack.c.b16 %v1050, %v1049
    %v1054 = vpack.c.b16 %v1052, %v1051
    %v1058 = vsel %vm1004, %v1036, 0
    %1060 = vmatprep.subr.bf16.mxu0 0
    %1061 = vmatpush1.bf16.msra.mxu0 %v1053
    %1062 = vmatprep.subr.bf16.mxu0 0
    %1063 = vmatpush1.bf16.msra.mxu0 %v1054
    %1064 = vmatprep.subr.bf16.mxu0 0
    %1065 = vmatpush1.bf16.msra.mxu0 0
    %1066 = vmatprep.subr.bf16.mxu0 0
    %1067 = vmatpush1.bf16.msra.mxu0 0
    %1068 = vmatprep.subr.bf16.mxu0 0
    %1069 = vmatpush1.bf16.msra.mxu0 0
    %1070 = vmatprep.subr.bf16.mxu0 0
    %1071 = vmatpush1.bf16.msra.mxu0 0
    %1072 = vmatprep.subr.bf16.mxu0 0
    %1073 = vmatpush1.bf16.msra.mxu0 0
    %1074 = vmatprep.subr.bf16.mxu0 0
    %1075 = vmatpush1.bf16.msra.mxu0 0
    %1076 = vmatprep.subr.bf16.mxu0 0
    %1077 = vmatpush1.bf16.msra.mxu0 0
    %1078 = vmatprep.subr.bf16.mxu0 0
    %1079 = vmatpush1.bf16.msra.mxu0 0
    %1080 = vmatprep.subr.bf16.mxu0 0
    %1081 = vmatpush1.bf16.msra.mxu0 0
    %1082 = vmatprep.subr.bf16.mxu0 0
    %1083 = vmatpush1.bf16.msra.mxu0 0
    %1084 = vmatprep.subr.bf16.mxu0 0
    %1085 = vmatpush1.bf16.msra.mxu0 0
    %1086 = vmatprep.subr.bf16.mxu0 0
    %1087 = vmatpush1.bf16.msra.mxu0 0
    %1088 = vmatprep.subr.bf16.mxu0 0
    %1089 = vmatpush1.bf16.msra.mxu0 0
    %1090 = vmatprep.subr.bf16.mxu0 0
    %1091 = vmatpush1.bf16.msra.mxu0 0
    %1092 = vmatprep.mubr.bf16.mxu0 0
    %1093 = vmatmul.mubr.bf16.gmra.mrb[0].mxu0 %v1058
    %v1094 = vpop.f32.mrb[0].mxu0
    %v1095 = vadd.f32 %v1044, %v1094
    %v1096 = vpop.f32.mrb[0].mxu0
    %v1097 = vpop.f32.mrb[0].mxu0
    %v1098 = vpop.f32.mrb[0].mxu0
    %1099 = vdwg.mxu0
    %1100 = vst [vmem:[#allocation5] sm:$0xff] %v1095
    // Predicated region
    $region30: #{tpu_custom_call.1} parent=1 // pred_check
      _
    $region31: #{tpu_custom_call.1} parent=1 // pred_check_branch
      %1102 = sbr.rel (0) target = $region33
    $region32: #{tpu_custom_call.1} parent=1 // pred_region
      %s1104 = ssub.s32 128, 128
      %1105 = vsyncadd [#allocation4], %s1104
      %s1107 = sshll.u32 [#allocation5], 4
      %s1108 = int_to_ptr.vmem [resolvable:$true] %s1107
      %1110 = dma.vmem_to_hbm [thread:$0]  %s1108, 128, %s6, [#allocation4]
    $region33: #{tpu_custom_call.1} parent=1 // pred_fallthru
      _
    // Predicated region
    $region34: #{tpu_custom_call.1} parent=1 // pred_check
      _
    $region35: #{tpu_custom_call.1} parent=1 // pred_check_branch
      %1112 = sbr.rel (0) target = $region37
    $region36: #{tpu_custom_call.1} parent=1 // pred_region
      %1113 = dma.done [#allocation4], 128
    $region37: #{tpu_custom_call.1} parent=1 // pred_fallthru
      _
    %1114 = vsyncpa [#allocation3], 1
    %1115 = vsyncpa [#allocation4], 1

</llo_original>
